<compile_context>
chip_gen: v6e
topology: v6e:2x2x1
jax: 0.10.0
libtpu: 0.0.40
codegen_flags: <defaults>
</compile_context>

<pallas_src>
import jax
import jax.numpy as jnp
from jax.experimental import pallas as pl
from jax.experimental.pallas import tpu as pltpu


def _relu_kernel(x_ref, o_ref):
    # Elementwise ReLU on the whole VMEM tile (single VPU max per vreg).
    o_ref[...] = jnp.maximum(x_ref[...], jnp.zeros((), x_ref.dtype))


# Per-block byte target (see header comment).
_TARGET_BLOCK_BYTES = 2 * 1024 * 1024
# Row-block multiple that satisfies sublane packing for 4-, 2- and 1-byte dtypes.
_ROW_MULTIPLE = 32


def _choose_block_rows(total_rows: int, width: int, itemsize: int) -> int:
    """Row-block of ~_TARGET_BLOCK_BYTES; full extent if everything fits in one block."""
    target_elems = max(_TARGET_BLOCK_BYTES // itemsize, 1)
    rows = max(target_elems // max(width, 1), 1)
    if rows >= total_rows:
        return total_rows  # single full-extent block (allowed even if < 8 rows)
    rows = max((rows // _ROW_MULTIPLE) * _ROW_MULTIPLE, _ROW_MULTIPLE)
    return min(rows, total_rows)


def _relu_2d(x2d: jax.Array) -> jax.Array:
    rows, width = x2d.shape
    block_rows = _choose_block_rows(rows, width, x2d.dtype.itemsize)
    grid = (pl.cdiv(rows, block_rows),)  # ragged last block is masked by Pallas
    return pl.pallas_call(
        _relu_kernel,
        out_shape=jax.ShapeDtypeStruct((rows, width), x2d.dtype),
        grid=grid,
        in_specs=[pl.BlockSpec((block_rows, width), lambda i: (i, 0))],
        out_specs=pl.BlockSpec((block_rows, width), lambda i: (i, 0)),
        compiler_params=pltpu.CompilerParams(dimension_semantics=("parallel",)),
    )(x2d)


def rectified_linear(x: jax.Array) -> jax.Array:
    """ReLU forward of RectifiedLinear, computed in a Pallas TPU kernel."""
    orig_shape = x.shape
    n = x.size
    if n == 0:
        return x

    # Fast path: total size divides a multiple of 128 -> free reshape to a
    # lane-dense slab (unmasked full-width vector stores, zero extra HBM passes).
    for lanes in (1024, 512, 256, 128):
        if n % lanes == 0:
            out = _relu_2d(x.reshape(n // lanes, lanes))
            return out.reshape(orig_shape)

    # Unaligned total size: collapse leading dims (free reshape) and keep the
    # trailing feature dim as the full-extent lane block.  No pad, no slice.
    width = orig_shape[-1] if x.ndim >= 2 else n
    out = _relu_2d(x.reshape(n // width, width))
    return out.reshape(orig_shape)


if __name__ == "__main__":
    key = jax.random.PRNGKey(0)
    # Small FSMN-style hidden activation: batch=2, time=8, input_dim=32.
    x = jax.random.normal(key, (2, 8, 32), dtype=jnp.float32)
    out = jax.block_until_ready(rectified_linear(x))
    assert out.shape == x.shape and out.dtype == x.dtype
    assert jnp.allclose(out, jnp.maximum(x, 0.0)), "mismatch vs reference ReLU"

    # Also exercise the non-128-multiple fallback path (no pad/slice involved).
    x_odd = jax.random.normal(jax.random.PRNGKey(1), (3, 700, 130), jnp.float32)
    out_odd = jax.block_until_ready(rectified_linear(x_odd))
    assert jnp.allclose(out_odd, jnp.maximum(x_odd, 0.0)), "mismatch (fallback path)"

    print("KERNEL_OK")
</pallas_src>

<mosaic_0001>
module attributes {stable_mosaic.version = 11 : i64} {
  func.func @_relu_kernel(%arg0: i32, %arg1: memref<1x512xf32, #tpu.memory_space<vmem>>, %arg2: memref<1x512xf32, #tpu.memory_space<vmem>>) attributes {dimension_semantics = [#tpu.dimension_semantics<parallel>], iteration_bounds = array<i64: 1>, scalar_prefetch = 0 : i64, scratch_operands = 0 : i64, tpu.core_type = #tpu.core_type<tc>, window_params = [{transform_indices = @transform_0, window_bounds = array<i64: 1, 512>}, {transform_indices = @transform_1, window_bounds = array<i64: 1, 512>}]} {
    %c0 = arith.constant 0 : index
    %c0_0 = arith.constant 0 : index
    %0 = vector.load %arg1[%c0, %c0_0] : memref<1x512xf32, #tpu.memory_space<vmem>>, vector<1x512xf32>
    %cst = arith.constant 0.000000e+00 : f32
    %1 = vector.broadcast %cst : f32 to vector<1x512xf32>
    %2 = arith.maximumf %0, %1 : vector<1x512xf32>
    %c0_1 = arith.constant 0 : index
    %c0_2 = arith.constant 0 : index
    %3 = vector.load %arg2[%c0_1, %c0_2] : memref<1x512xf32, #tpu.memory_space<vmem>>, vector<1x512xf32>
    tpu.vector_store %arg2[%c0_1, %c0_2], %2 {strides = array<i32>} : memref<1x512xf32, #tpu.memory_space<vmem>>, vector<1x512xf32>,
    return
  }
  func.func @transform_0(%arg0: i32) -> (i32, i32) {
    %c0_i32 = arith.constant 0 : i32
    %c0_i32_0 = arith.constant 0 : i32
    return %arg0, %c0_i32 : i32, i32
  }
  func.func @transform_1(%arg0: i32) -> (i32, i32) {
    %c0_i32 = arith.constant 0 : i32
    %c0_i32_0 = arith.constant 0 : i32
    return %arg0, %c0_i32 : i32, i32
  }
}

</mosaic_0001>

<llo_original>
// kernel: tpu_custom_call.1
$region0: #{tpu_custom_call.1}
  #allocation0 [shape = 'u32[]', space=smem, size = 0x4, offset = 0x4, fixed_abs, tag = 'smem constant byte address 0x4 - core index']
  #allocation1 [shape = 'u32[144,128]{1,0:T(1,128)}', space=vmem, size = 0x12000, scoped, tag = 'internal scratch']
  %s0 = inlined_call_operand.hbm [shape: f32[1,512], index: 0, kind: input, shape index: {}]
  %s1 = inlined_call_operand.hbm [shape: f32[1,512], index: 1, kind: output, shape index: {}]
  %s2 = sld [smem:[#allocation0]]
  $region18: #{tpu_custom_call.1} parent=0
    _
  %s4 = ssub.s32 1, %s2
  %s5 = scalar_select 0, %s4, %s2
  $region1: #{tpu_custom_call.1} parent=0
    #allocation2 [shape = 'u8[2048]{0}', space=vmem, size = 0x800, scoped, tag = 'input window, operand 0, single buffered']
    #allocation3 [shape = 's32[1]{0}', space=sflag, size = 0x4, scoped, tag = 'scoped memory for tpu_custom_call.1']
    #allocation4 [shape = 's32[1]{0}', space=sflag, size = 0x4, scoped, tag = 'scoped memory for tpu_custom_call.1']
    #allocation5 [shape = 'u8[2048]{0}', space=vmem, size = 0x800, scoped, tag = 'output window, operand 0, single buffered']
    %6 = vsyncpa [#allocation3], 0
    %7 = vsyncpa [#allocation4], 0
    // Predicated region
    $region2: #{tpu_custom_call.1} parent=1 // pred_check
      _
    $region3: #{tpu_custom_call.1} parent=1 // pred_check_branch
      %9 = sbr.rel (0) target = $region5
    $region4: #{tpu_custom_call.1} parent=1 // pred_region
      %s11 = ssub.s32 64, 64
      %12 = vsyncadd [#allocation3], %s11
      %s14 = sshll.u32 [#allocation2], 4
      %s15 = int_to_ptr.vmem [resolvable:$true] %s14
      %17 = dma.hbm_to_vmem [thread:$0]  %s0, 64, %s15, [#allocation3]
    $region5: #{tpu_custom_call.1} parent=1 // pred_fallthru
      _
    // Predicated region
    $region6: #{tpu_custom_call.1} parent=1 // pred_check
      _
    $region7: #{tpu_custom_call.1} parent=1 // pred_check_branch
      %19 = sbr.rel (0) target = $region9
    $region8: #{tpu_custom_call.1} parent=1 // pred_region
      %20 = dma.done [#allocation3], 64
    $region9: #{tpu_custom_call.1} parent=1 // pred_fallthru
      _
    %v21 = vld [vmem:[#allocation2] sm:$0xf]
    %v22 = vmax.f32 %v21, 0.0
    %v23 = vlaneseq
    %vm24 = vcmp.ge.s32.totalorder %v23, 0
    %vm25 = vcmp.lt.s32.totalorder %v23, 512
    %vm26 = vmand %vm24, %vm25
    %27 = vst.msk [vmem:[#allocation5] sm:$0xf] %vm26, %v22
    // Predicated region
    $region10: #{tpu_custom_call.1} parent=1 // pred_check
      _
    $region11: #{tpu_custom_call.1} parent=1 // pred_check_branch
      %29 = sbr.rel (0) target = $region13
    $region12: #{tpu_custom_call.1} parent=1 // pred_region
      %s31 = ssub.s32 64, 64
      %32 = vsyncadd [#allocation4], %s31
      %s34 = sshll.u32 [#allocation5], 4
      %s35 = int_to_ptr.vmem [resolvable:$true] %s34
      %37 = dma.vmem_to_hbm [thread:$0]  %s35, 64, %s1, [#allocation4]
    $region13: #{tpu_custom_call.1} parent=1 // pred_fallthru
      _
    // Predicated region
    $region14: #{tpu_custom_call.1} parent=1 // pred_check
      _
    $region15: #{tpu_custom_call.1} parent=1 // pred_check_branch
      %39 = sbr.rel (0) target = $region17
    $region16: #{tpu_custom_call.1} parent=1 // pred_region
      %40 = dma.done [#allocation4], 64
    $region17: #{tpu_custom_call.1} parent=1 // pred_fallthru
      _
    %41 = vsyncpa [#allocation3], 1
    %42 = vsyncpa [#allocation4], 1

</llo_original>
